<compile_context>
chip_gen: v6e
topology: v6e:2x2x1
jax: 0.10.0
libtpu: 0.0.40
codegen_flags: <defaults>
</compile_context>

<pallas_src>
import jax
import jax.numpy as jnp
from jax.experimental import pallas as pl
from jax.experimental.pallas import tpu as pltpu


def _round_up(n, m):
    return (n + m - 1) // m * m


def moe_gen_kernel(x_ref, g_ref, w_in_ref, b_in_ref, w_hid_ref, b_hid_ref,
                   w_mix_ref, b_mix_ref,
                   sample_ref, probs_ref, logsample_ref):
    tm = x_ref.shape[0]
    num_classes = probs_ref.shape[-1]

    # ---- MoeMlpPolicy trunk: two Linear + ReLU layers ----
    # NOTE: at production sizes (H >= 128) cast x / weights to bf16 for the MXU
    # (keep preferred_element_type=f32) on v6e/v7x; f32 kept here for the toy sizes.
    x = x_ref[...]                                                    # (tm, D_in)
    h1 = jnp.maximum(
        jnp.dot(x, w_in_ref[...], preferred_element_type=jnp.float32)
        + b_in_ref[...], 0.0)                                         # (tm, H)
    h2 = jnp.maximum(
        jnp.dot(h1, w_hid_ref[...], preferred_element_type=jnp.float32)
        + b_hid_ref[...], 0.0)                                        # (tm, H)

    # ---- mixture heads pre-folded with pi in the wrapper (single matmul) ----
    logits = (jnp.dot(h2, w_mix_ref[...], preferred_element_type=jnp.float32)
              + b_mix_ref[...])                                       # (tm, C)

    # ---- softmax / log-softmax (reuse exp; no second exp for probs) ----
    m = jnp.max(logits, axis=-1, keepdims=True)
    z = logits - m
    e = jnp.exp(z)
    denom = jnp.sum(e, axis=-1, keepdims=True)
    probs_ref[...] = e * pl.reciprocal(denom, approx=False)           # exact 1/x
    log_pi = z - jnp.log(denom)                                       # log_softmax

    # ---- categorical sampling via Gumbel-max (gumbel noise supplied) ----
    y = logits + g_ref[...]
    ymax = jnp.max(y, axis=-1, keepdims=True)
    col = jax.lax.broadcasted_iota(jnp.int32, y.shape, 1)
    cand = jnp.where(y == ymax, col, num_classes)                     # first-occurrence argmax
    sample_col = jnp.min(cand, axis=-1, keepdims=True)                # (tm, 1) i32

    # log_prob(sample) = log_pi gathered at the sampled class
    logsample_col = jnp.sum(jnp.where(col == sample_col, log_pi, 0.0),
                            axis=-1, keepdims=True)                   # (tm, 1) f32

    # ---- lane-dense scalar outputs: (tm, 1) column -> (1, tm) row ----
    # Put tokens on the lane axis via an eye-mask select + sublane reduction
    # (VPU select + XLU reduce), so the write-back is a dense (1, tm) store
    # instead of a masked 1-lane store per token tile.
    r = jax.lax.broadcasted_iota(jnp.int32, (tm, tm), 0)
    c = jax.lax.broadcasted_iota(jnp.int32, (tm, tm), 1)
    eye = r == c
    sample_row = jnp.sum(jnp.where(eye, sample_col.astype(jnp.float32), 0.0),
                         axis=0, keepdims=True)                       # (1, tm)
    sample_ref[...] = sample_row.astype(jnp.int32)
    logsample_ref[...] = jnp.sum(jnp.where(eye, logsample_col, 0.0),
                                 axis=0, keepdims=True)               # (1, tm)


def moe_gen_policy(x, gumbel, params, *, tm=None):
    """x: [B, S, input_dim] f32, gumbel: [B, S, C] f32 (Gumbel(0,1) noise).
    Returns (sample_groups [B,S] i32, probs [B,S,C] f32, log_sample [B,S,1] f32)."""
    B, S, D_in = x.shape
    N = B * S
    w_in, b_in, w_hid, b_hid, w_heads, b_heads, pi = params
    H = w_in.shape[1]
    n_comp, _, C = w_heads.shape

    # Fold the mixture weights pi into a single head (exact by linearity).
    w_mix = jnp.einsum('i,ihc->hc', pi, w_heads)                      # (H, C)
    b_mix = jnp.sum(pi[:, None] * b_heads, axis=0, keepdims=True)     # (1, C)

    # Token tile: large tiles amortize the ~0.35us per-grid-step overhead and
    # fill the MXU sublanes; cap at 256 and pad N up to a multiple of tm.
    # (On v7x keep >= 2 grid steps at production N so both TensorCores work.)
    if tm is None:
        tm = min(256, _round_up(N, 8))
    N_pad = _round_up(N, tm)
    num_tiles = N_pad // tm

    x_flat = x.reshape(N, D_in)
    g_flat = gumbel.reshape(N, C)
    if N_pad != N:
        x_flat = jnp.pad(x_flat, ((0, N_pad - N), (0, 0)))
        g_flat = jnp.pad(g_flat, ((0, N_pad - N), (0, 0)))

    fixed = lambda i: (0, 0)

    cost = pl.CostEstimate(
        flops=2 * N_pad * (D_in * H + H * H + H * C),
        transcendentals=N_pad * (C + 1),
        bytes_accessed=4 * (N_pad * (D_in + 2 * C + 2)
                            + D_in * H + H * H + H * C + 2 * H + 2 * C),
    )

    sample, probs, log_sample = pl.pallas_call(
        moe_gen_kernel,
        out_shape=(
            jax.ShapeDtypeStruct((num_tiles, 1, tm), jnp.int32),
            jax.ShapeDtypeStruct((N_pad, C), jnp.float32),
            jax.ShapeDtypeStruct((num_tiles, 1, tm), jnp.float32),
        ),
        grid=(num_tiles,),
        in_specs=[
            pl.BlockSpec((tm, D_in), lambda i: (i, 0)),   # x tile
            pl.BlockSpec((tm, C), lambda i: (i, 0)),      # gumbel tile
            # Weights are grid-invariant (fixed index maps).  At production
            # sizes they should be single-buffered / prologue-DMA'd (pl.ANY +
            # make_async_copy) to free VMEM for even larger token tiles.
            pl.BlockSpec((D_in, H), fixed),               # input_fc.weight (transposed)
            pl.BlockSpec((1, H), fixed),                  # input_fc.bias
            pl.BlockSpec((H, H), fixed),                  # hidden_fc.weight (transposed)
            pl.BlockSpec((1, H), fixed),                  # hidden_fc.bias
            pl.BlockSpec((H, C), fixed),                  # pi-mixed head weight
            pl.BlockSpec((1, C), fixed),                  # pi-mixed head bias
        ],
        out_specs=(
            pl.BlockSpec((None, 1, tm), lambda i: (i, 0, 0)),   # sample (lane-dense)
            pl.BlockSpec((tm, C), lambda i: (i, 0)),            # probs
            pl.BlockSpec((None, 1, tm), lambda i: (i, 0, 0)),   # log_sample (lane-dense)
        ),
        compiler_params=pltpu.CompilerParams(
            dimension_semantics=("parallel",)),
        cost_estimate=cost,
    )(x_flat, g_flat, w_in, b_in, w_hid, b_hid, w_mix, b_mix)

    sample = sample.reshape(N_pad)[:N].reshape(B, S)
    probs = probs[:N].reshape(B, S, C)
    log_sample = log_sample.reshape(N_pad)[:N].reshape(B, S, 1)
    return sample, probs, log_sample


def moe_gen_reference(x, gumbel, params):
    """Pure-JAX reference mirroring the PyTorch MoeGenPolicy forward."""
    w_in, b_in, w_hid, b_hid, w_heads, b_heads, pi = params
    h1 = jnp.maximum(x @ w_in + b_in[0], 0.0)
    h2 = jnp.maximum(h1 @ w_hid + b_hid[0], 0.0)
    logits_mix = jnp.zeros(x.shape[:-1] + (w_heads.shape[-1],), jnp.float32)
    for i in range(w_heads.shape[0]):                      # mixes LOGITS, like the reference
        logits_mix = logits_mix + pi[i] * (h2 @ w_heads[i] + b_heads[i])
    log_pi = jax.nn.log_softmax(logits_mix, axis=-1)
    probs = jnp.exp(log_pi)
    sample = jnp.argmax(logits_mix + gumbel, axis=-1).astype(jnp.int32)
    return sample, probs, log_pi


def init_params(key, n_component, input_dim, hidden_dim, cluster_num):
    """Deterministic init mirroring nn.Linear / pi uniform init shapes."""
    ks = jax.random.split(key, 8)

    def linear(kw, kb, fan_in, fan_out):
        bound = 1.0 / jnp.sqrt(fan_in)
        w = jax.random.uniform(kw, (fan_in, fan_out), jnp.float32, -bound, bound)
        b = jax.random.uniform(kb, (1, fan_out), jnp.float32, -bound, bound)
        return w, b

    w_in, b_in = linear(ks[0], ks[1], input_dim, hidden_dim)
    w_hid, b_hid = linear(ks[2], ks[3], hidden_dim, hidden_dim)

    bound = 1.0 / jnp.sqrt(hidden_dim)
    w_heads = jax.random.uniform(
        ks[4], (n_component, hidden_dim, cluster_num), jnp.float32, -bound, bound)
    b_heads = jax.random.uniform(
        ks[5], (n_component, cluster_num), jnp.float32, -bound, bound)

    lo = 1.0 / n_component
    pi = jax.random.uniform(ks[6], (n_component,), jnp.float32, lo, lo + 0.01)
    return (w_in, b_in, w_hid, b_hid, w_heads, b_heads, pi)


if __name__ == "__main__":
    B, S = 2, 8
    n_component, input_dim, hidden_dim, cluster_num = 3, 12, 32, 5

    root = jax.random.PRNGKey(0)
    k_param, k_x, k_gumbel = jax.random.split(root, 3)

    params = init_params(k_param, n_component, input_dim, hidden_dim, cluster_num)
    x = jax.random.normal(k_x, (B, S, input_dim), jnp.float32)
    # Gumbel noise for in-kernel categorical sampling (Gumbel-max trick).
    gumbel = jax.random.gumbel(k_gumbel, (B, S, cluster_num), jnp.float32)

    sample_groups, probs, log_sample = jax.block_until_ready(
        moe_gen_policy(x, gumbel, params))

    assert sample_groups.shape == (B, S) and sample_groups.dtype == jnp.int32
    assert probs.shape == (B, S, cluster_num)
    assert log_sample.shape == (B, S, 1)
    # sanity: probs are a softmax -> rows sum to 1
    assert jnp.allclose(probs.sum(-1), 1.0, atol=1e-5)
    # sanity: samples are valid class indices
    assert bool(jnp.all((sample_groups >= 0) & (sample_groups < cluster_num)))

    # compare against a pure-JAX reference of the PyTorch forward
    ref_sample, ref_probs, ref_log_pi = moe_gen_reference(x, gumbel, params)
    assert jnp.allclose(probs, ref_probs, atol=1e-5, rtol=1e-5)
    ref_log_sample = jnp.take_along_axis(ref_log_pi, sample_groups[..., None], axis=-1)
    assert jnp.allclose(log_sample, ref_log_sample, atol=1e-5, rtol=1e-5)

    print("KERNEL_OK")
</pallas_src>

<mosaic_0001>
module attributes {stable_mosaic.version = 11 : i64} {
  func.func @moe_gen_kernel(%arg0: i32, %arg1: memref<16x12xf32, #tpu.memory_space<vmem>>, %arg2: memref<16x5xf32, #tpu.memory_space<vmem>>, %arg3: memref<12x32xf32, #tpu.memory_space<vmem>>, %arg4: memref<1x32xf32, #tpu.memory_space<vmem>>, %arg5: memref<32x32xf32, #tpu.memory_space<vmem>>, %arg6: memref<1x32xf32, #tpu.memory_space<vmem>>, %arg7: memref<32x5xf32, #tpu.memory_space<vmem>>, %arg8: memref<1x5xf32, #tpu.memory_space<vmem>>, %arg9: memref<1x1x16xi32, #tpu.memory_space<vmem>>, %arg10: memref<16x5xf32, #tpu.memory_space<vmem>>, %arg11: memref<1x1x16xf32, #tpu.memory_space<vmem>>) attributes {dimension_semantics = [#tpu.dimension_semantics<parallel>], iteration_bounds = array<i64: 1>, scalar_prefetch = 0 : i64, scratch_operands = 0 : i64, tpu.core_type = #tpu.core_type<tc>, window_params = [{transform_indices = @transform_0, window_bounds = array<i64: 16, 12>}, {transform_indices = @transform_1, window_bounds = array<i64: 16, 5>}, {pipeline_mode = #tpu.pipeline_mode<synchronous>, transform_indices = @transform_2, window_bounds = array<i64: 12, 32>}, {pipeline_mode = #tpu.pipeline_mode<synchronous>, transform_indices = @transform_3, window_bounds = array<i64: 1, 32>}, {pipeline_mode = #tpu.pipeline_mode<synchronous>, transform_indices = @transform_4, window_bounds = array<i64: 32, 32>}, {pipeline_mode = #tpu.pipeline_mode<synchronous>, transform_indices = @transform_5, window_bounds = array<i64: 1, 32>}, {pipeline_mode = #tpu.pipeline_mode<synchronous>, transform_indices = @transform_6, window_bounds = array<i64: 32, 5>}, {pipeline_mode = #tpu.pipeline_mode<synchronous>, transform_indices = @transform_7, window_bounds = array<i64: 1, 5>}, {transform_indices = @transform_8, window_bounds = array<i64: 1, 1, 16>}, {transform_indices = @transform_9, window_bounds = array<i64: 16, 5>}, {transform_indices = @transform_10, window_bounds = array<i64: 1, 1, 16>}]} {
    %c0 = arith.constant 0 : index
    %c0_0 = arith.constant 0 : index
    %0 = vector.load %arg1[%c0, %c0_0] : memref<16x12xf32, #tpu.memory_space<vmem>>, vector<16x12xf32>
    %c0_1 = arith.constant 0 : index
    %c0_2 = arith.constant 0 : index
    %1 = vector.load %arg3[%c0_1, %c0_2] : memref<12x32xf32, #tpu.memory_space<vmem>>, vector<12x32xf32>
    %cst = arith.constant dense<0.000000e+00> : vector<16x32xf32>
    %2 = tpu.matmul %0, %1, %cst {dimension_numbers = #tpu.dot_dimension_numbers<[1], [0], [0], [1], [0, 0, 1, 1], [], []>} : vector<16x12xf32>, vector<12x32xf32>, vector<16x32xf32> -> vector<16x32xf32>
    %c0_3 = arith.constant 0 : index
    %c0_4 = arith.constant 0 : index
    %3 = vector.load %arg4[%c0_3, %c0_4] : memref<1x32xf32, #tpu.memory_space<vmem>>, vector<1x32xf32>
    %4 = vector.broadcast %3 : vector<1x32xf32> to vector<16x32xf32>
    %5 = arith.addf %2, %4 : vector<16x32xf32>
    %cst_5 = arith.constant 0.000000e+00 : f32
    %6 = vector.broadcast %cst_5 : f32 to vector<16x32xf32>
    %7 = arith.maximumf %5, %6 : vector<16x32xf32>
    %c0_6 = arith.constant 0 : index
    %c0_7 = arith.constant 0 : index
    %8 = vector.load %arg5[%c0_6, %c0_7] : memref<32x32xf32, #tpu.memory_space<vmem>>, vector<32x32xf32>
    %cst_8 = arith.constant dense<0.000000e+00> : vector<16x32xf32>
    %9 = tpu.matmul %7, %8, %cst_8 {dimension_numbers = #tpu.dot_dimension_numbers<[1], [0], [0], [1], [0, 0, 1, 1], [], []>} : vector<16x32xf32>, vector<32x32xf32>, vector<16x32xf32> -> vector<16x32xf32>
    %c0_9 = arith.constant 0 : index
    %c0_10 = arith.constant 0 : index
    %10 = vector.load %arg6[%c0_9, %c0_10] : memref<1x32xf32, #tpu.memory_space<vmem>>, vector<1x32xf32>
    %11 = vector.broadcast %10 : vector<1x32xf32> to vector<16x32xf32>
    %12 = arith.addf %9, %11 : vector<16x32xf32>
    %cst_11 = arith.constant 0.000000e+00 : f32
    %13 = vector.broadcast %cst_11 : f32 to vector<16x32xf32>
    %14 = arith.maximumf %12, %13 : vector<16x32xf32>
    %c0_12 = arith.constant 0 : index
    %c0_13 = arith.constant 0 : index
    %15 = vector.load %arg7[%c0_12, %c0_13] : memref<32x5xf32, #tpu.memory_space<vmem>>, vector<32x5xf32>
    %cst_14 = arith.constant dense<0.000000e+00> : vector<16x5xf32>
    %16 = tpu.matmul %14, %15, %cst_14 {dimension_numbers = #tpu.dot_dimension_numbers<[1], [0], [0], [1], [0, 0, 1, 1], [], []>} : vector<16x32xf32>, vector<32x5xf32>, vector<16x5xf32> -> vector<16x5xf32>
    %c0_15 = arith.constant 0 : index
    %c0_16 = arith.constant 0 : index
    %17 = vector.load %arg8[%c0_15, %c0_16] : memref<1x5xf32, #tpu.memory_space<vmem>>, vector<1x5xf32>
    %18 = vector.broadcast %17 : vector<1x5xf32> to vector<16x5xf32>
    %19 = arith.addf %16, %18 : vector<16x5xf32>
    %cst_17 = arith.constant dense<0xFF800000> : vector<16xf32>
    %20 = vector.multi_reduction <maximumf>, %19, %cst_17 [1] : vector<16x5xf32> to vector<16xf32>
    %21 = vector.shape_cast %20 : vector<16xf32> to vector<16x1xf32>
    %22 = vector.broadcast %21 : vector<16x1xf32> to vector<16x5xf32>
    %23 = arith.subf %19, %22 : vector<16x5xf32>
    %24 = math.exp %23 : vector<16x5xf32>
    %cst_18 = arith.constant dense<0.000000e+00> : vector<16xf32>
    %25 = vector.multi_reduction <add>, %24, %cst_18 [1] : vector<16x5xf32> to vector<16xf32>
    %26 = vector.shape_cast %25 : vector<16xf32> to vector<16x1xf32>
    %27 = tpu.reciprocal %26 : vector<16x1xf32> -> vector<16x1xf32>
    %28 = vector.broadcast %27 : vector<16x1xf32> to vector<16x5xf32>
    %29 = arith.mulf %24, %28 : vector<16x5xf32>
    %c0_19 = arith.constant 0 : index
    %c0_20 = arith.constant 0 : index
    %30 = vector.load %arg10[%c0_19, %c0_20] : memref<16x5xf32, #tpu.memory_space<vmem>>, vector<16x5xf32>
    tpu.vector_store %arg10[%c0_19, %c0_20], %29 {strides = array<i32>} : memref<16x5xf32, #tpu.memory_space<vmem>>, vector<16x5xf32>,
    %31 = math.log %26 : vector<16x1xf32>
    %32 = vector.broadcast %31 : vector<16x1xf32> to vector<16x5xf32>
    %33 = arith.subf %23, %32 : vector<16x5xf32>
    %c0_21 = arith.constant 0 : index
    %c0_22 = arith.constant 0 : index
    %34 = vector.load %arg2[%c0_21, %c0_22] : memref<16x5xf32, #tpu.memory_space<vmem>>, vector<16x5xf32>
    %35 = arith.addf %19, %34 : vector<16x5xf32>
    %cst_23 = arith.constant dense<0xFF800000> : vector<16xf32>
    %36 = vector.multi_reduction <maximumf>, %35, %cst_23 [1] : vector<16x5xf32> to vector<16xf32>
    %37 = vector.shape_cast %36 : vector<16xf32> to vector<16x1xf32>
    %38 = tpu.iota {dimensions = array<i32: 1>} : vector<16x5xi32>
    %39 = vector.broadcast %37 : vector<16x1xf32> to vector<16x5xf32>
    %40 = arith.cmpf oeq, %35, %39 : vector<16x5xf32>
    %c5_i32 = arith.constant 5 : i32
    %41 = vector.broadcast %c5_i32 : i32 to vector<16x5xi32>
    %42 = arith.select %40, %38, %41 : vector<16x5xi1>, vector<16x5xi32>
    %cst_24 = arith.constant dense<2147483647> : vector<16xi32>
    %43 = vector.multi_reduction <minsi>, %42, %cst_24 [1] : vector<16x5xi32> to vector<16xi32>
    %44 = vector.shape_cast %43 : vector<16xi32> to vector<16x1xi32>
    %45 = vector.broadcast %44 : vector<16x1xi32> to vector<16x5xi32>
    %46 = arith.cmpi eq, %38, %45 : vector<16x5xi32>
    %cst_25 = arith.constant 0.000000e+00 : f32
    %47 = vector.broadcast %cst_25 : f32 to vector<16x5xf32>
    %48 = arith.select %46, %33, %47 : vector<16x5xi1>, vector<16x5xf32>
    %cst_26 = arith.constant dense<0.000000e+00> : vector<16xf32>
    %49 = vector.multi_reduction <add>, %48, %cst_26 [1] : vector<16x5xf32> to vector<16xf32>
    %50 = vector.shape_cast %49 : vector<16xf32> to vector<16x1xf32>
    %51 = tpu.iota {dimensions = array<i32: 0>} : vector<16x16xi32>
    %52 = tpu.iota {dimensions = array<i32: 1>} : vector<16x16xi32>
    %53 = arith.cmpi eq, %51, %52 : vector<16x16xi32>
    %54 = arith.sitofp %44 : vector<16x1xi32> to vector<16x1xf32>
    %cst_27 = arith.constant 0.000000e+00 : f32
    %55 = vector.shape_cast %54 : vector<16x1xf32> to vector<16x1xf32>
    %56 = vector.broadcast %55 : vector<16x1xf32> to vector<16x16xf32>
    %57 = vector.broadcast %cst_27 : f32 to vector<16x16xf32>
    %58 = arith.select %53, %56, %57 : vector<16x16xi1>, vector<16x16xf32>
    %cst_28 = arith.constant dense<0.000000e+00> : vector<16xf32>
    %59 = vector.multi_reduction <add>, %58, %cst_28 [0] : vector<16x16xf32> to vector<16xf32>
    %60 = vector.shape_cast %59 : vector<16xf32> to vector<1x16xf32>
    %61 = arith.fptosi %60 : vector<1x16xf32> to vector<1x16xi32>
    %c0_29 = arith.constant 0 : index
    %c0_30 = arith.constant 0 : index
    %c0_31 = arith.constant 0 : index
    %62 = vector.load %arg9[%c0_29, %c0_30, %c0_31] : memref<1x1x16xi32, #tpu.memory_space<vmem>>, vector<1x1x16xi32>
    %63 = vector.shape_cast %62 : vector<1x1x16xi32> to vector<1x16xi32>
    %64 = vector.shape_cast %61 : vector<1x16xi32> to vector<1x1x16xi32>
    tpu.vector_store %arg9[%c0_29, %c0_30, %c0_31], %64 {strides = array<i32>} : memref<1x1x16xi32, #tpu.memory_space<vmem>>, vector<1x1x16xi32>,
    %cst_32 = arith.constant 0.000000e+00 : f32
    %65 = vector.shape_cast %50 : vector<16x1xf32> to vector<16x1xf32>
    %66 = vector.broadcast %65 : vector<16x1xf32> to vector<16x16xf32>
    %67 = vector.broadcast %cst_32 : f32 to vector<16x16xf32>
    %68 = arith.select %53, %66, %67 : vector<16x16xi1>, vector<16x16xf32>
    %cst_33 = arith.constant dense<0.000000e+00> : vector<16xf32>
    %69 = vector.multi_reduction <add>, %68, %cst_33 [0] : vector<16x16xf32> to vector<16xf32>
    %70 = vector.shape_cast %69 : vector<16xf32> to vector<1x16xf32>
    %c0_34 = arith.constant 0 : index
    %c0_35 = arith.constant 0 : index
    %c0_36 = arith.constant 0 : index
    %71 = vector.load %arg11[%c0_34, %c0_35, %c0_36] : memref<1x1x16xf32, #tpu.memory_space<vmem>>, vector<1x1x16xf32>
    %72 = vector.shape_cast %71 : vector<1x1x16xf32> to vector<1x16xf32>
    %73 = vector.shape_cast %70 : vector<1x16xf32> to vector<1x1x16xf32>
    tpu.vector_store %arg11[%c0_34, %c0_35, %c0_36], %73 {strides = array<i32>} : memref<1x1x16xf32, #tpu.memory_space<vmem>>, vector<1x1x16xf32>,
    return
  }
  func.func @transform_0(%arg0: i32) -> (i32, i32) {
    %c0_i32 = arith.constant 0 : i32
    %c0_i32_0 = arith.constant 0 : i32
    return %arg0, %c0_i32 : i32, i32
  }
  func.func @transform_1(%arg0: i32) -> (i32, i32) {
    %c0_i32 = arith.constant 0 : i32
    %c0_i32_0 = arith.constant 0 : i32
    return %arg0, %c0_i32 : i32, i32
  }
  func.func @transform_2(%arg0: i32) -> (i32, i32) {
    %c0_i32 = arith.constant 0 : i32
    %c0_i32_0 = arith.constant 0 : i32
    %c0_i32_1 = arith.constant 0 : i32
    return %c0_i32, %c0_i32_0 : i32, i32
  }
  func.func @transform_3(%arg0: i32) -> (i32, i32) {
    %c0_i32 = arith.constant 0 : i32
    %c0_i32_0 = arith.constant 0 : i32
    %c0_i32_1 = arith.constant 0 : i32
    return %c0_i32, %c0_i32_0 : i32, i32
  }
  func.func @transform_4(%arg0: i32) -> (i32, i32) {
    %c0_i32 = arith.constant 0 : i32
    %c0_i32_0 = arith.constant 0 : i32
    %c0_i32_1 = arith.constant 0 : i32
    return %c0_i32, %c0_i32_0 : i32, i32
  }
  func.func @transform_5(%arg0: i32) -> (i32, i32) {
    %c0_i32 = arith.constant 0 : i32
    %c0_i32_0 = arith.constant 0 : i32
    %c0_i32_1 = arith.constant 0 : i32
    return %c0_i32, %c0_i32_0 : i32, i32
  }
  func.func @transform_6(%arg0: i32) -> (i32, i32) {
    %c0_i32 = arith.constant 0 : i32
    %c0_i32_0 = arith.constant 0 : i32
    %c0_i32_1 = arith.constant 0 : i32
    return %c0_i32, %c0_i32_0 : i32, i32
  }
  func.func @transform_7(%arg0: i32) -> (i32, i32) {
    %c0_i32 = arith.constant 0 : i32
    %c0_i32_0 = arith.constant 0 : i32
    %c0_i32_1 = arith.constant 0 : i32
    return %c0_i32, %c0_i32_0 : i32, i32
  }
  func.func @transform_8(%arg0: i32) -> (i32, i32, i32) {
    %c0_i32 = arith.constant 0 : i32
    %c0_i32_0 = arith.constant 0 : i32
    %c0_i32_1 = arith.constant 0 : i32
    return %arg0, %c0_i32, %c0_i32_0 : i32, i32, i32
  }
  func.func @transform_9(%arg0: i32) -> (i32, i32) {
    %c0_i32 = arith.constant 0 : i32
    %c0_i32_0 = arith.constant 0 : i32
    return %arg0, %c0_i32 : i32, i32
  }
  func.func @transform_10(%arg0: i32) -> (i32, i32, i32) {
    %c0_i32 = arith.constant 0 : i32
    %c0_i32_0 = arith.constant 0 : i32
    %c0_i32_1 = arith.constant 0 : i32
    return %arg0, %c0_i32, %c0_i32_0 : i32, i32, i32
  }
}

</mosaic_0001>

<llo_original>
// kernel: tpu_custom_call.1
$region0: #{tpu_custom_call.1}
  #allocation0 [shape = 'u32[]', space=smem, size = 0x4, offset = 0x4, fixed_abs, tag = 'smem constant byte address 0x4 - core index']
  #allocation1 [shape = 'u32[144,128]{1,0:T(1,128)}', space=vmem, size = 0x12000, scoped, tag = 'internal scratch']
  %s0 = inlined_call_operand.vmem [shape: f32[16,12], index: 0, kind: input, shape index: {}]
  %s1 = inlined_call_operand.vmem [shape: f32[16,5], index: 1, kind: input, shape index: {}]
  %s2 = inlined_call_operand.vmem [shape: f32[12,32], index: 2, kind: input, shape index: {}]
  %s3 = inlined_call_operand.vmem [shape: f32[1,32], index: 3, kind: input, shape index: {}]
  %s4 = inlined_call_operand.vmem [shape: f32[32,32], index: 4, kind: input, shape index: {}]
  %s5 = inlined_call_operand.hbm [shape: f32[1,32], index: 5, kind: input, shape index: {}]
  %s6 = inlined_call_operand.vmem [shape: f32[32,5], index: 6, kind: input, shape index: {}]
  %s7 = inlined_call_operand.vmem [shape: f32[1,5], index: 7, kind: input, shape index: {}]
  %s8 = inlined_call_operand.hbm [shape: s32[1,1,16], index: 8, kind: output, shape index: {0}]
  %s9 = inlined_call_operand.vmem [shape: f32[16,5], index: 9, kind: output, shape index: {1}]
  %s10 = inlined_call_operand.hbm [shape: f32[1,1,16], index: 10, kind: output, shape index: {2}]
  %11 = xla_tuple %s8, %s9, %s10
  %s12 = sld [smem:[#allocation0]]
  $region62: #{tpu_custom_call.1} parent=0
    _
  %s14 = ssub.s32 1, %s12
  %s15 = scalar_select 0, %s14, %s12
  $region1: #{tpu_custom_call.1} parent=0
    #allocation2 [shape = 'u8[512]{0}', space=vmem, size = 0x400, scoped, tag = 'input window, operand 5, single buffered']
    #allocation3 [shape = 's32[1]{0}', space=sflag, size = 0x4, scoped, tag = 'scoped memory for tpu_custom_call.1']
    #allocation4 [shape = 's32[1]{0}', space=sflag, size = 0x4, scoped, tag = 'scoped memory for tpu_custom_call.1']
    #allocation5 [shape = 'u8[512]{0}', space=vmem, size = 0x400, scoped, tag = 'output window, operand 0, single buffered']
    #allocation6 [shape = 'u8[512]{0}', space=vmem, size = 0x400, scoped, tag = 'output window, operand 2, single buffered']
    #allocation7 [shape = 's32[1]{0}', space=sflag, size = 0x4, scoped, tag = 'scoped memory for tpu_custom_call.1']
    %16 = vsyncpa [#allocation3], 0
    %17 = vsyncpa [#allocation4], 0
    %18 = vsyncpa [#allocation7], 0
    // Predicated region
    $region2: #{tpu_custom_call.1} parent=1 // pred_check
      _
    $region3: #{tpu_custom_call.1} parent=1 // pred_check_branch
      %20 = sbr.rel (0) target = $region5
    $region4: #{tpu_custom_call.1} parent=1 // pred_region
      _
    $region5: #{tpu_custom_call.1} parent=1 // pred_fallthru
      _
    // Predicated region
    $region6: #{tpu_custom_call.1} parent=1 // pred_check
      _
    $region7: #{tpu_custom_call.1} parent=1 // pred_check_branch
      %22 = sbr.rel (0) target = $region9
    $region8: #{tpu_custom_call.1} parent=1 // pred_region
      _
    $region9: #{tpu_custom_call.1} parent=1 // pred_fallthru
      _
    // Predicated region
    $region10: #{tpu_custom_call.1} parent=1 // pred_check
      _
    $region11: #{tpu_custom_call.1} parent=1 // pred_check_branch
      %24 = sbr.rel (0) target = $region13
    $region12: #{tpu_custom_call.1} parent=1 // pred_region
      _
    $region13: #{tpu_custom_call.1} parent=1 // pred_fallthru
      _
    // Predicated region
    $region14: #{tpu_custom_call.1} parent=1 // pred_check
      _
    $region15: #{tpu_custom_call.1} parent=1 // pred_check_branch
      %26 = sbr.rel (0) target = $region17
    $region16: #{tpu_custom_call.1} parent=1 // pred_region
      _
    $region17: #{tpu_custom_call.1} parent=1 // pred_fallthru
      _
    // Predicated region
    $region18: #{tpu_custom_call.1} parent=1 // pred_check
      _
    $region19: #{tpu_custom_call.1} parent=1 // pred_check_branch
      %28 = sbr.rel (0) target = $region21
    $region20: #{tpu_custom_call.1} parent=1 // pred_region
      _
    $region21: #{tpu_custom_call.1} parent=1 // pred_fallthru
      _
    // Predicated region
    $region22: #{tpu_custom_call.1} parent=1 // pred_check
      _
    $region23: #{tpu_custom_call.1} parent=1 // pred_check_branch
      %30 = sbr.rel (0) target = $region25
    $region24: #{tpu_custom_call.1} parent=1 // pred_region
      %s32 = ssub.s32 16, 16
      %33 = vsyncadd [#allocation3], %s32
      %s35 = sshll.u32 [#allocation2], 4
      %s36 = int_to_ptr.vmem [resolvable:$true] %s35
      %38 = dma.hbm_to_vmem [thread:$0]  %s5, 16, %s36, [#allocation3]
    $region25: #{tpu_custom_call.1} parent=1 // pred_fallthru
      _
    // Predicated region
    $region26: #{tpu_custom_call.1} parent=1 // pred_check
      _
    $region27: #{tpu_custom_call.1} parent=1 // pred_check_branch
      %40 = sbr.rel (0) target = $region29
    $region28: #{tpu_custom_call.1} parent=1 // pred_region
      _
    $region29: #{tpu_custom_call.1} parent=1 // pred_fallthru
      _
    // Predicated region
    $region30: #{tpu_custom_call.1} parent=1 // pred_check
      _
    $region31: #{tpu_custom_call.1} parent=1 // pred_check_branch
      %42 = sbr.rel (0) target = $region33
    $region32: #{tpu_custom_call.1} parent=1 // pred_region
      _
    $region33: #{tpu_custom_call.1} parent=1 // pred_fallthru
      _
    // Predicated region
    $region34: #{tpu_custom_call.1} parent=1 // pred_check
      _
    $region35: #{tpu_custom_call.1} parent=1 // pred_check_branch
      %44 = sbr.rel (0) target = $region37
    $region36: #{tpu_custom_call.1} parent=1 // pred_region
      %45 = dma.done [#allocation3], 16
    $region37: #{tpu_custom_call.1} parent=1 // pred_fallthru
      _
    %v46 = vld [vmem:[%s0] sm:$0xff]
    %v47 = vld [vmem:[%s0 + $0x8] sm:$0xff]
    %v48 = vld [vmem:[%s2] sm:$0xff]
    %v49 = vld [vmem:[%s2 + $0x8] sm:$0xf]
    %v50 = vld [vmem:[%s3] sm:$0x1]
    %v52 = vlaneseq
    %v53 = vshrl.u32 %v52, 7
    %v54 = vsub.s32 0, %v53
    %v55 = vrot.slane %v50, %v54
    %vm57 = vcmask 97280
    %v59 = vsel %vm57, %v46, 0
    %v62 = vsel %vm57, %v47, 0
    %vm64 = vcmask 1043456
    %v66 = vsel %vm64, %v49, 0
    %68 = vmatprep.subr.mxu0 0.0
    %69 = vmatpush1.msra.mxu0 0.0
    %70 = vmatprep.subr.mxu0 0.0
    %71 = vmatpush1.msra.mxu0 0.0
    %72 = vmatprep.subr.mxu0 0.0
    %73 = vmatpush1.msra.mxu0 0.0
    %74 = vmatprep.subr.mxu0 0.0
    %75 = vmatpush1.msra.mxu0 0.0
    %76 = vmatprep.subr.mxu0 0.0
    %77 = vmatpush1.msra.mxu0 0.0
    %78 = vmatprep.subr.mxu0 0.0
    %79 = vmatpush1.msra.mxu0 0.0
    %80 = vmatprep.subr.mxu0 0.0
    %81 = vmatpush1.msra.mxu0 0.0
    %82 = vmatprep.subr.mxu0 0.0
    %83 = vmatpush1.msra.mxu0 0.0
    %84 = vmatprep.subr.mxu0 0.0
    %85 = vmatpush1.msra.mxu0 0.0
    %86 = vmatprep.subr.mxu0 0.0
    %87 = vmatpush1.msra.mxu0 0.0
    %88 = vmatprep.subr.mxu0 0.0
    %89 = vmatpush1.msra.mxu0 0.0
    %90 = vmatprep.subr.mxu0 0.0
    %91 = vmatpush1.msra.mxu0 0.0
    %92 = vmatprep.subr.mxu0 0.0
    %93 = vmatpush1.msra.mxu0 0.0
    %94 = vmatprep.subr.mxu0 0.0
    %95 = vmatpush1.msra.mxu0 0.0
    %96 = vmatprep.subr.mxu0 0.0
    %97 = vmatpush1.msra.mxu0 %v66
    %98 = vmatprep.subr.mxu0 0.0
    %99 = vmatpush1.msra.mxu0 %v48
    %100 = vmatprep.subr.mxu0 0.0
    %101 = vmatpush2.msra.mxu0 0.0
    %102 = vmatprep.subr.mxu0 0.0
    %103 = vmatpush2.msra.mxu0 0.0
    %104 = vmatprep.subr.mxu0 0.0
    %105 = vmatpush2.msra.mxu0 0.0
    %106 = vmatprep.subr.mxu0 0.0
    %107 = vmatpush2.msra.mxu0 0.0
    %108 = vmatprep.subr.mxu0 0.0
    %109 = vmatpush2.msra.mxu0 0.0
    %110 = vmatprep.subr.mxu0 0.0
    %111 = vmatpush2.msra.mxu0 0.0
    %112 = vmatprep.subr.mxu0 0.0
    %113 = vmatpush2.msra.mxu0 0.0
    %114 = vmatprep.subr.mxu0 0.0
    %115 = vmatpush2.msra.mxu0 0.0
    %116 = vmatprep.subr.mxu0 0.0
    %117 = vmatpush2.msra.mxu0 0.0
    %118 = vmatprep.subr.mxu0 0.0
    %119 = vmatpush2.msra.mxu0 0.0
    %120 = vmatprep.subr.mxu0 0.0
    %121 = vmatpush2.msra.mxu0 0.0
    %122 = vmatprep.subr.mxu0 0.0
    %123 = vmatpush2.msra.mxu0 0.0
    %124 = vmatprep.subr.mxu0 0.0
    %125 = vmatpush2.msra.mxu0 0.0
    %126 = vmatprep.subr.mxu0 0.0
    %127 = vmatpush2.msra.mxu0 0.0
    %128 = vmatprep.subr.mxu0 0.0
    %129 = vmatpush2.msra.mxu0 0.0
    %130 = vmatprep.subr.mxu0 0.0
    %131 = vmatpush2.msra.mxu0 0.0
    %132 = vmatprep.mubr.f32.mxu0 0.0
    %133 = vmatmul.mubr.f32.gmra.mxu0 %v59
    %v134 = vpop.f32.mrf.mxu0
    %v135 = vadd.f32 %v55, %v134
    %v136 = vpop.f32.mrf.mxu0
    %137 = vmatprep.mubr.f32.mxu0 0.0
    %138 = vmatmul.mubr.f32.gmra.mxu0 %v62
    %v139 = vpop.f32.mrf.mxu0
    %v140 = vadd.f32 %v55, %v139
    %v141 = vpop.f32.mrf.mxu0
    %142 = vdwg.mxu0
    %v143 = vmax.f32 %v135, 0.0
    %v144 = vmax.f32 %v140, 0.0
    %v145 = vld [vmem:[%s4] sm:$0xff]
    %v146 = vld [vmem:[%s4 + $0x8] sm:$0xff]
    %v147 = vld [vmem:[%s4 + $0x10] sm:$0xff]
    %v148 = vld [vmem:[%s4 + $0x18] sm:$0xff]
    %v149 = vld [vmem:[#allocation2] sm:$0x1]
    %v151 = vlaneseq
    %v152 = vshrl.u32 %v151, 7
    %v153 = vsub.s32 0, %v152
    %v154 = vrot.slane %v149, %v153
    %vm156 = vcmask 261120
    %v158 = vsel %vm156, %v143, 0
    %v161 = vsel %vm156, %v144, 0
    %163 = vmatprep.subr.mxu0 0.0
    %164 = vmatpush1.msra.mxu0 0.0
    %165 = vmatprep.subr.mxu0 0.0
    %166 = vmatpush1.msra.mxu0 0.0
    %167 = vmatprep.subr.mxu0 0.0
    %168 = vmatpush1.msra.mxu0 0.0
    %169 = vmatprep.subr.mxu0 0.0
    %170 = vmatpush1.msra.mxu0 0.0
    %171 = vmatprep.subr.mxu0 0.0
    %172 = vmatpush1.msra.mxu0 0.0
    %173 = vmatprep.subr.mxu0 0.0
    %174 = vmatpush1.msra.mxu0 0.0
    %175 = vmatprep.subr.mxu0 0.0
    %176 = vmatpush1.msra.mxu0 0.0
    %177 = vmatprep.subr.mxu0 0.0
    %178 = vmatpush1.msra.mxu0 0.0
    %179 = vmatprep.subr.mxu0 0.0
    %180 = vmatpush1.msra.mxu0 0.0
    %181 = vmatprep.subr.mxu0 0.0
    %182 = vmatpush1.msra.mxu0 0.0
    %183 = vmatprep.subr.mxu0 0.0
    %184 = vmatpush1.msra.mxu0 0.0
    %185 = vmatprep.subr.mxu0 0.0
    %186 = vmatpush1.msra.mxu0 0.0
    %187 = vmatprep.subr.mxu0 0.0
    %188 = vmatpush1.msra.mxu0 %v148
    %189 = vmatprep.subr.mxu0 0.0
    %190 = vmatpush1.msra.mxu0 %v147
    %191 = vmatprep.subr.mxu0 0.0
    %192 = vmatpush1.msra.mxu0 %v146
    %193 = vmatprep.subr.mxu0 0.0
    %194 = vmatpush1.msra.mxu0 %v145
    %195 = vmatprep.subr.mxu0 0.0
    %196 = vmatpush2.msra.mxu0 0.0
    %197 = vmatprep.subr.mxu0 0.0
    %198 = vmatpush2.msra.mxu0 0.0
    %199 = vmatprep.subr.mxu0 0.0
    %200 = vmatpush2.msra.mxu0 0.0
    %201 = vmatprep.subr.mxu0 0.0
    %202 = vmatpush2.msra.mxu0 0.0
    %203 = vmatprep.subr.mxu0 0.0
    %204 = vmatpush2.msra.mxu0 0.0
    %205 = vmatprep.subr.mxu0 0.0
    %206 = vmatpush2.msra.mxu0 0.0
    %207 = vmatprep.subr.mxu0 0.0
    %208 = vmatpush2.msra.mxu0 0.0
    %209 = vmatprep.subr.mxu0 0.0
    %210 = vmatpush2.msra.mxu0 0.0
    %211 = vmatprep.subr.mxu0 0.0
    %212 = vmatpush2.msra.mxu0 0.0
    %213 = vmatprep.subr.mxu0 0.0
    %214 = vmatpush2.msra.mxu0 0.0
    %215 = vmatprep.subr.mxu0 0.0
    %216 = vmatpush2.msra.mxu0 0.0
    %217 = vmatprep.subr.mxu0 0.0
    %218 = vmatpush2.msra.mxu0 0.0
    %219 = vmatprep.subr.mxu0 0.0
    %220 = vmatpush2.msra.mxu0 0.0
    %221 = vmatprep.subr.mxu0 0.0
    %222 = vmatpush2.msra.mxu0 0.0
    %223 = vmatprep.subr.mxu0 0.0
    %224 = vmatpush2.msra.mxu0 0.0
    %225 = vmatprep.subr.mxu0 0.0
    %226 = vmatpush2.msra.mxu0 0.0
    %227 = vmatprep.mubr.f32.mxu0 0.0
    %228 = vmatmul.mubr.f32.gmra.mxu0 %v158
    %v229 = vpop.f32.mrf.mxu0
    %v230 = vadd.f32 %v154, %v229
    %v231 = vpop.f32.mrf.mxu0
    %232 = vmatprep.mubr.f32.mxu0 0.0
    %233 = vmatmul.mubr.f32.gmra.mxu0 %v161
    %v234 = vpop.f32.mrf.mxu0
    %v235 = vadd.f32 %v154, %v234
    %v236 = vpop.f32.mrf.mxu0
    %237 = vdwg.mxu0
    %v238 = vmax.f32 %v230, 0.0
    %v239 = vmax.f32 %v235, 0.0
    %v240 = vld [vmem:[%s6] sm:$0xff]
    %v241 = vld [vmem:[%s6 + $0x8] sm:$0xff]
    %v242 = vld [vmem:[%s6 + $0x10] sm:$0xff]
    %v243 = vld [vmem:[%s6 + $0x18] sm:$0xff]
    %v244 = vld [vmem:[%s7] sm:$0x1]
    %v246 = vlaneseq
    %v247 = vshrl.u32 %v246, 7
    %v248 = vsub.s32 0, %v247
    %v249 = vrot.slane %v244, %v248
    %v252 = vsel %vm156, %v238, 0
    %v255 = vsel %vm156, %v239, 0
    %257 = vmatprep.subr.mxu0 0.0
    %258 = vmatpush1.msra.mxu0 0.0
    %259 = vmatprep.subr.mxu0 0.0
    %260 = vmatpush1.msra.mxu0 0.0
    %261 = vmatprep.subr.mxu0 0.0
    %262 = vmatpush1.msra.mxu0 0.0
    %263 = vmatprep.subr.mxu0 0.0
    %264 = vmatpush1.msra.mxu0 0.0
    %265 = vmatprep.subr.mxu0 0.0
    %266 = vmatpush1.msra.mxu0 0.0
    %267 = vmatprep.subr.mxu0 0.0
    %268 = vmatpush1.msra.mxu0 0.0
    %269 = vmatprep.subr.mxu0 0.0
    %270 = vmatpush1.msra.mxu0 0.0
    %271 = vmatprep.subr.mxu0 0.0
    %272 = vmatpush1.msra.mxu0 0.0
    %273 = vmatprep.subr.mxu0 0.0
    %274 = vmatpush1.msra.mxu0 0.0
    %275 = vmatprep.subr.mxu0 0.0
    %276 = vmatpush1.msra.mxu0 0.0
    %277 = vmatprep.subr.mxu0 0.0
    %278 = vmatpush1.msra.mxu0 0.0
    %279 = vmatprep.subr.mxu0 0.0
    %280 = vmatpush1.msra.mxu0 0.0
    %281 = vmatprep.subr.mxu0 0.0
    %282 = vmatpush1.msra.mxu0 %v243
    %283 = vmatprep.subr.mxu0 0.0
    %284 = vmatpush1.msra.mxu0 %v242
    %285 = vmatprep.subr.mxu0 0.0
    %286 = vmatpush1.msra.mxu0 %v241
    %287 = vmatprep.subr.mxu0 0.0
    %288 = vmatpush1.msra.mxu0 %v240
    %289 = vmatprep.subr.mxu0 0.0
    %290 = vmatpush2.msra.mxu0 0.0
    %291 = vmatprep.subr.mxu0 0.0
    %292 = vmatpush2.msra.mxu0 0.0
    %293 = vmatprep.subr.mxu0 0.0
    %294 = vmatpush2.msra.mxu0 0.0
    %295 = vmatprep.subr.mxu0 0.0
    %296 = vmatpush2.msra.mxu0 0.0
    %297 = vmatprep.subr.mxu0 0.0
    %298 = vmatpush2.msra.mxu0 0.0
    %299 = vmatprep.subr.mxu0 0.0
    %300 = vmatpush2.msra.mxu0 0.0
    %301 = vmatprep.subr.mxu0 0.0
    %302 = vmatpush2.msra.mxu0 0.0
    %303 = vmatprep.subr.mxu0 0.0
    %304 = vmatpush2.msra.mxu0 0.0
    %305 = vmatprep.subr.mxu0 0.0
    %306 = vmatpush2.msra.mxu0 0.0
    %307 = vmatprep.subr.mxu0 0.0
    %308 = vmatpush2.msra.mxu0 0.0
    %309 = vmatprep.subr.mxu0 0.0
    %310 = vmatpush2.msra.mxu0 0.0
    %311 = vmatprep.subr.mxu0 0.0
    %312 = vmatpush2.msra.mxu0 0.0
    %313 = vmatprep.subr.mxu0 0.0
    %314 = vmatpush2.msra.mxu0 0.0
    %315 = vmatprep.subr.mxu0 0.0
    %316 = vmatpush2.msra.mxu0 0.0
    %317 = vmatprep.subr.mxu0 0.0
    %318 = vmatpush2.msra.mxu0 0.0
    %319 = vmatprep.subr.mxu0 0.0
    %320 = vmatpush2.msra.mxu0 0.0
    %321 = vmatprep.mubr.f32.mxu0 0.0
    %322 = vmatmul.mubr.f32.gmra.mxu0 %v252
    %v323 = vpop.f32.mrf.mxu0
    %v324 = vadd.f32 %v249, %v323
    %v325 = vpop.f32.mrf.mxu0
    %326 = vmatprep.mubr.f32.mxu0 0.0
    %327 = vmatmul.mubr.f32.gmra.mxu0 %v255
    %v328 = vpop.f32.mrf.mxu0
    %v329 = vadd.f32 %v249, %v328
    %v330 = vpop.f32.mrf.mxu0
    %331 = vdwg.mxu0
    %vm332 = vcmask 39936
    %v333 = vsel %vm332, %v324, -inf
    %334 = vmax.xlane.f32.xlu0 %v333
    %v335 = vpop.xlane.xlu0 %334
    %v336 = vsel %vm332, %v329, -inf
    %337 = vmax.xlane.f32.xlu0 %v336
    %v338 = vpop.xlane.xlu0 %337
    %v339 = vsub.f32 %v324, %v335
    %v340 = vsub.f32 %v329, %v338
    %v341 = vmul.f32 %v339, 1.442695
    %v342 = vpow.pop %v341
    %v343 = vmul.f32 %v340, 1.442695
    %v344 = vpow.pop %v343
    %v345 = vsel %vm332, %v342, 0.0
    %346 = vadd.xlane.f32.xlu0 %v345
    %v347 = vpop.xlane.xlu0 %346
    %v348 = vsel %vm332, %v344, 0.0
    %349 = vadd.xlane.f32.xlu0 %v348
    %v350 = vpop.xlane.xlu0 %349
    %v351 = vrcp.pop %v347
    %v352 = vrcp.pop %v350
    %v353 = vmul.f32 %v342, %v351
    %v354 = vmul.f32 %v344, %v352
    %355 = vst.msk [vmem:[%s9] sm:$0xff] %vm332, %v353
    %356 = vst.msk [vmem:[%s9 + $0x8] sm:$0xff] %vm332, %v354
    %v357 = vlog2.pop %v347
    %v358 = vmul.f32 %v357, 0.6931472
    %v359 = vlog2.pop %v350
    %v360 = vmul.f32 %v359, 0.6931472
    %v361 = vsub.f32 %v339, %v358
    %v362 = vsub.f32 %v340, %v360
    %v363 = vld [vmem:[%s1] sm:$0xff]
    %v364 = vld [vmem:[%s1 + $0x8] sm:$0xff]
    %v365 = vadd.f32 %v324, %v363
    %v366 = vadd.f32 %v329, %v364
    %v367 = vsel %vm332, %v365, -inf
    %368 = vmax.xlane.f32.xlu0 %v367
    %v369 = vpop.xlane.xlu0 %368
    %v370 = vsel %vm332, %v366, -inf
    %371 = vmax.xlane.f32.xlu0 %v370
    %v372 = vpop.xlane.xlu0 %371
    %v373 = vlaneseq
    %v374 = vand.u32 %v373, 127
    %vm375 = vcmp.eq.f32.partialorder %v365, %v369
    %vm376 = vcmp.eq.f32.partialorder %v366, %v372
    %v377 = vsel %vm375, %v374, 5
    %v378 = vsel %vm376, %v374, 5
    %v379 = vsel %vm332, %v377, 2147483647
    %v380 = vand.u32 %v379, 65535
    %v381 = vshra.s32 %v379, 16
    %v382 = vcvt.s32.f32 %v380
    %v383 = vcvt.s32.f32 %v381
    %384 = vmin.xlane.f32.xlu0 %v383
    %v385 = vpop.xlane.xlu0 %384
    %vm386 = vcmp.eq.f32.partialorder %v383, %v385
    %v387 = vsel %vm386, %v382, inf
    %388 = vmin.xlane.f32.xlu0 %v387
    %v389 = vpop.xlane.xlu0 %388
    %v390 = vcvt.f32.s32 %v389
    %v391 = vcvt.f32.s32 %v385
    %v392 = vshll.u32 %v391, 16
    %v393 = vadd.s32 %v392, %v390
    %v394 = vsel %vm332, %v378, 2147483647
    %v395 = vand.u32 %v394, 65535
    %v396 = vshra.s32 %v394, 16
    %v397 = vcvt.s32.f32 %v395
    %v398 = vcvt.s32.f32 %v396
    %399 = vmin.xlane.f32.xlu0 %v398
    %v400 = vpop.xlane.xlu0 %399
    %vm401 = vcmp.eq.f32.partialorder %v398, %v400
    %v402 = vsel %vm401, %v397, inf
    %403 = vmin.xlane.f32.xlu0 %v402
    %v404 = vpop.xlane.xlu0 %403
    %v405 = vcvt.f32.s32 %v404
    %v406 = vcvt.f32.s32 %v400
    %v407 = vshll.u32 %v406, 16
    %v408 = vadd.s32 %v407, %v405
    %vm409 = vcmp.eq.s32.totalorder %v374, %v393
    %vm410 = vcmp.eq.s32.totalorder %v374, %v408
    %v411 = vsel %vm409, %v361, 0.0
    %v412 = vsel %vm410, %v362, 0.0
    %v413 = vsel %vm332, %v411, 0.0
    %414 = vadd.xlane.f32.xlu0 %v413
    %v415 = vpop.xlane.xlu0 %414
    %v416 = vsel %vm332, %v412, 0.0
    %417 = vadd.xlane.f32.xlu0 %v416
    %v418 = vpop.xlane.xlu0 %417
    %v419 = vlaneseq
    %v420 = vshrl.u32 %v419, 7
    %v421 = vadd.s32 %v420, 8
    %vm422 = vcmp.eq.s32.totalorder %v420, %v374
    %vm423 = vcmp.eq.s32.totalorder %v421, %v374
    %v424 = vcvt.s32.f32 %v393
    %v425 = vcvt.s32.f32 %v408
    %v426 = vsel %vm422, %v424, 0.0
    %v427 = vsel %vm423, %v425, 0.0
    %vm428 = vcmask 130048
    %v429 = vsel %vm428, %v426, 0.0
    %v430 = vsel %vm428, %v427, 0.0
    %v431 = vadd.f32 %v429, %v430
    %v432 = vrot.slane %v431, 4
    %v433 = vadd.f32 %v431, %v432
    %v434 = vrot.slane %v433, 2
    %v435 = vadd.f32 %v433, %v434
    %v436 = vrot.slane %v435, 1
    %v437 = vadd.f32 %v435, %v436
    %v438 = vcvt.f32.s32.to.zero.pseudo %v437
    %vm439 = vcmask 122880
    %440 = vst.msk [vmem:[#allocation5] sm:$0x1] %vm439, %v438
    %v441 = vsel %vm422, %v415, 0.0
    %v442 = vsel %vm423, %v418, 0.0
    %v443 = vsel %vm428, %v441, 0.0
    %v444 = vsel %vm428, %v442, 0.0
    %v445 = vadd.f32 %v443, %v444
    %v446 = vrot.slane %v445, 4
    %v447 = vadd.f32 %v445, %v446
    %v448 = vrot.slane %v447, 2
    %v449 = vadd.f32 %v447, %v448
    %v450 = vrot.slane %v449, 1
    %v451 = vadd.f32 %v449, %v450
    %452 = vst.msk [vmem:[#allocation6] sm:$0x1] %vm439, %v451
    // Predicated region
    $region38: #{tpu_custom_call.1} parent=1 // pred_check
      _
    $region39: #{tpu_custom_call.1} parent=1 // pred_check_branch
      %454 = sbr.rel (0) target = $region41
    $region40: #{tpu_custom_call.1} parent=1 // pred_region
      %s456 = ssub.s32 16, 16
      %457 = vsyncadd [#allocation4], %s456
      %s459 = sshll.u32 [#allocation5], 4
      %s460 = int_to_ptr.vmem [resolvable:$true] %s459
      %462 = dma.vmem_to_hbm [thread:$0]  %s460, 16, %s8, [#allocation4]
    $region41: #{tpu_custom_call.1} parent=1 // pred_fallthru
      _
    // Predicated region
    $region42: #{tpu_custom_call.1} parent=1 // pred_check
      _
    $region43: #{tpu_custom_call.1} parent=1 // pred_check_branch
      %464 = sbr.rel (0) target = $region45
    $region44: #{tpu_custom_call.1} parent=1 // pred_region
      _
    $region45: #{tpu_custom_call.1} parent=1 // pred_fallthru
      _
    // Predicated region
    $region46: #{tpu_custom_call.1} parent=1 // pred_check
      _
    $region47: #{tpu_custom_call.1} parent=1 // pred_check_branch
      %466 = sbr.rel (0) target = $region49
    $region48: #{tpu_custom_call.1} parent=1 // pred_region
      %s468 = ssub.s32 16, 16
      %469 = vsyncadd [#allocation7], %s468
      %s471 = sshll.u32 [#allocation6], 4
      %s472 = int_to_ptr.vmem [resolvable:$true] %s471
      %474 = dma.vmem_to_hbm [thread:$0]  %s472, 16, %s10, [#allocation7]
    $region49: #{tpu_custom_call.1} parent=1 // pred_fallthru
      _
    // Predicated region
    $region50: #{tpu_custom_call.1} parent=1 // pred_check
      _
    $region51: #{tpu_custom_call.1} parent=1 // pred_check_branch
      %476 = sbr.rel (0) target = $region53
    $region52: #{tpu_custom_call.1} parent=1 // pred_region
      %477 = dma.done [#allocation4], 16
    $region53: #{tpu_custom_call.1} parent=1 // pred_fallthru
      _
    // Predicated region
    $region54: #{tpu_custom_call.1} parent=1 // pred_check
      _
    $region55: #{tpu_custom_call.1} parent=1 // pred_check_branch
      %479 = sbr.rel (0) target = $region57
    $region56: #{tpu_custom_call.1} parent=1 // pred_region
      _
    $region57: #{tpu_custom_call.1} parent=1 // pred_fallthru
      _
    // Predicated region
    $region58: #{tpu_custom_call.1} parent=1 // pred_check
      _
    $region59: #{tpu_custom_call.1} parent=1 // pred_check_branch
      %481 = sbr.rel (0) target = $region61
    $region60: #{tpu_custom_call.1} parent=1 // pred_region
      %482 = dma.done [#allocation7], 16
    $region61: #{tpu_custom_call.1} parent=1 // pred_fallthru
      _
    %483 = vsyncpa [#allocation3], 1
    %484 = vsyncpa [#allocation4], 1
    %485 = vsyncpa [#allocation7], 1

</llo_original>
